<compile_context>
chip_gen: v7x
topology: tpu7x:2x2x1
jax: 0.10.0
libtpu: 0.0.40
codegen_flags: <defaults>
</compile_context>

<pallas_src>
import functools

import jax
import jax.numpy as jnp
from jax.experimental import pallas as pl
from jax.experimental.pallas import tpu as pltpu

_K = 4 * 6  # number of weighted loss terms in WeightOut.__init__


def _weight_out_kernel(packed_ref, out_ref, *, K):
    """Fused stable-softmax(weight) * loss -> mean, one lane-axis reduce.

    packed_ref : VMEM (2, K) f32 ; row 0 = loss terms, row 1 = weight_out.
    out_ref    : VMEM (1, 1) f32 scalar result.
    """
    x = packed_ref[...]                                   # (2, K)
    loss = x[0:1, :]                                      # (1, K)
    w = x[1:2, :]                                         # (1, K)

    # Numerically stable softmax numerator: one lane-axis max + one exp (EUP).
    m = jnp.max(w, axis=-1, keepdims=True)                # (1, 1)
    e = jnp.exp(w - m)                                    # (1, K)

    # mean(loss * softmax(w)) == sum(loss * e) / (K * sum(e))
    # Single fused XLU reduce over both rows: [loss*e ; e] -> (2, 1).
    rows = jnp.concatenate([loss * e, e], axis=0)         # (2, K)
    s = jnp.sum(rows, axis=-1, keepdims=True)             # (2, 1)
    out_ref[...] = s[0:1, :] / (s[1:2, :] * float(K))     # exact divide


def weight_out_forward(loss, weight_out):
    """Pallas implementation of WeightOut.forward(loss).

    weight_out : (K, 1, 1, 1) parameter, K = 4 * 6 = 24.
    loss       : array (or Python scalar) broadcastable against weight_out,
                 typically shape (K, 1, 1, 1).
    returns    : () f32 scalar  mean(loss * softmax(weight_out, dim=0))
    """
    K = weight_out.shape[0]
    loss = jnp.asarray(loss, dtype=jnp.float32)

    # Scalar-loss shortcut: softmax sums to 1, so the whole forward collapses
    # to loss / K. Skips the pallas_call launch + DMAs entirely.
    if loss.size == 1:
        return loss.reshape(()) / jnp.float32(K)

    # Layout plumbing: one lane-dense (2, K) f32 tile -> single HBM->VMEM DMA.
    w_row = weight_out.astype(jnp.float32).reshape(1, K)
    if loss.size == K:
        loss_row = loss.reshape(1, K)
    else:
        # Rare general-broadcast case; materialize once.
        loss_row = jnp.broadcast_to(loss, weight_out.shape).reshape(1, K)
    packed = jnp.concatenate([loss_row, w_row], axis=0)   # (2, K)

    kernel = functools.partial(_weight_out_kernel, K=K)
    out = pl.pallas_call(
        kernel,
        out_shape=jax.ShapeDtypeStruct((1, 1), jnp.float32),
        in_specs=[pl.BlockSpec(memory_space=pltpu.MemorySpace.VMEM)],
        out_specs=pl.BlockSpec(memory_space=pltpu.MemorySpace.VMEM),
    )(packed)
    return out.reshape(())


def reference_weight_out(loss, weight_out):
    """Pure-JAX reference mirroring the PyTorch forward."""
    sm = jax.nn.softmax(weight_out.reshape(-1).astype(jnp.float32), axis=0)
    sm = sm.reshape(weight_out.shape)
    return jnp.mean(jnp.asarray(loss, jnp.float32) * sm)


if __name__ == "__main__":
    key = jax.random.PRNGKey(0)

    K = _K  # 24 weighted loss terms, as in WeightOut.__init__
    # Parameter init exactly as in the module: softmax(ones(24,1,1,1), dim=0).
    weight_out = jax.nn.softmax(jnp.ones((K, 1, 1, 1), jnp.float32), axis=0)
    # Per-branch loss values (positive, loss-like), deterministic.
    loss = jax.random.uniform(key, (K, 1, 1, 1), dtype=jnp.float32,
                              minval=0.0, maxval=2.0)

    # Kernel path (vector loss).
    out = weight_out_forward(loss, weight_out)
    out = jax.block_until_ready(out)
    ref = reference_weight_out(loss, weight_out)
    assert jnp.allclose(out, ref, rtol=1e-5, atol=1e-6), (float(out), float(ref))

    # Scalar-loss shortcut path (no pallas_call).
    s_out = jax.block_until_ready(weight_out_forward(jnp.float32(1.5), weight_out))
    s_ref = reference_weight_out(jnp.full((K, 1, 1, 1), 1.5, jnp.float32), weight_out)
    assert jnp.allclose(s_out, s_ref, rtol=1e-5, atol=1e-6), (float(s_out), float(s_ref))

    print("KERNEL_OK")
</pallas_src>

<mosaic_0001>
module attributes {stable_mosaic.version = 11 : i64} {
  func.func @_weight_out_kernel(%arg0: memref<2x24xf32, #tpu.memory_space<vmem>>, %arg1: memref<1x1xf32, #tpu.memory_space<vmem>>) attributes {dimension_semantics = [], scalar_prefetch = 0 : i64, scratch_operands = 0 : i64, tpu.core_type = #tpu.core_type<tc>} {
    %c0 = arith.constant 0 : index
    %c0_0 = arith.constant 0 : index
    %0 = vector.load %arg0[%c0, %c0_0] : memref<2x24xf32, #tpu.memory_space<vmem>>, vector<2x24xf32>
    %1 = vector.extract_strided_slice %0 {offsets = [0, 0], sizes = [1, 24], strides = [1, 1]} : vector<2x24xf32> to vector<1x24xf32>
    %2 = vector.extract_strided_slice %0 {offsets = [1, 0], sizes = [1, 24], strides = [1, 1]} : vector<2x24xf32> to vector<1x24xf32>
    %cst = arith.constant dense<0xFF800000> : vector<1xf32>
    %3 = vector.multi_reduction <maximumf>, %2, %cst [1] : vector<1x24xf32> to vector<1xf32>
    %4 = vector.shape_cast %3 : vector<1xf32> to vector<1x1xf32>
    %5 = vector.broadcast %4 : vector<1x1xf32> to vector<1x24xf32>
    %6 = arith.subf %2, %5 : vector<1x24xf32>
    %7 = math.exp %6 : vector<1x24xf32>
    %8 = arith.mulf %1, %7 : vector<1x24xf32>
    %9 = tpu.concatenate %8, %7 in 0 : vector<1x24xf32>, vector<1x24xf32> -> vector<2x24xf32>
    %cst_1 = arith.constant dense<0.000000e+00> : vector<2xf32>
    %10 = vector.multi_reduction <add>, %9, %cst_1 [1] : vector<2x24xf32> to vector<2xf32>
    %11 = vector.shape_cast %10 : vector<2xf32> to vector<2x1xf32>
    %12 = vector.extract_strided_slice %11 {offsets = [0, 0], sizes = [1, 1], strides = [1, 1]} : vector<2x1xf32> to vector<1x1xf32>
    %13 = vector.extract_strided_slice %11 {offsets = [1, 0], sizes = [1, 1], strides = [1, 1]} : vector<2x1xf32> to vector<1x1xf32>
    %cst_2 = arith.constant 2.400000e+01 : f32
    %14 = vector.broadcast %cst_2 : f32 to vector<1x1xf32>
    %15 = arith.mulf %13, %14 : vector<1x1xf32>
    %16 = arith.divf %12, %15 : vector<1x1xf32>
    %c0_3 = arith.constant 0 : index
    %c0_4 = arith.constant 0 : index
    %17 = vector.load %arg1[%c0_3, %c0_4] : memref<1x1xf32, #tpu.memory_space<vmem>>, vector<1x1xf32>
    tpu.vector_store %arg1[%c0_3, %c0_4], %16 {strides = array<i32>} : memref<1x1xf32, #tpu.memory_space<vmem>>, vector<1x1xf32>,
    return
  }
}

</mosaic_0001>

<llo_original>
// kernel: tpu_custom_call.1
$region0: #{tpu_custom_call.1}
  #allocation0 [shape = 'u32[]', space=smem, size = 0x4, offset = 0x4, fixed_abs, tag = 'smem constant byte address 0x4 - core index']
  #allocation1 [shape = 'u32[144,128]{1,0:T(1,128)}', space=vmem, size = 0x12000, scoped, tag = 'internal scratch']
  %s0 = inlined_call_operand.hbm [shape: f32[2,24], index: 0, kind: input, shape index: {}]
  %s1 = inlined_call_operand.hbm [shape: f32[1,1], index: 1, kind: output, shape index: {}]
  %s2 = sld [smem:[#allocation0]]
  $region18: #{tpu_custom_call.1} parent=0
    _
  %s4 = ssub.s32 1, %s2
  %s5 = scalar_select 0, %s4, %s2
  $region1: #{tpu_custom_call.1} parent=0
    #allocation2 [shape = 'u8[1024]{0}', space=vmem, size = 0x400, scoped, tag = 'input window, operand 0, single buffered']
    #allocation3 [shape = 's32[1]{0}', space=sflag, size = 0x4, scoped, tag = 'scoped memory for tpu_custom_call.1']
    #allocation4 [shape = 's32[1]{0}', space=sflag, size = 0x4, scoped, tag = 'scoped memory for tpu_custom_call.1']
    #allocation5 [shape = 'u8[512]{0}', space=vmem, size = 0x400, scoped, tag = 'output window, operand 0, single buffered']
    %6 = vsyncpa [#allocation3], 0
    %7 = vsyncpa [#allocation4], 0
    // Predicated region
    $region2: #{tpu_custom_call.1} parent=1 // pred_check
      _
    $region3: #{tpu_custom_call.1} parent=1 // pred_check_branch
      %9 = sbr.rel (0) target = $region5
    $region4: #{tpu_custom_call.1} parent=1 // pred_region
      %s11 = ssub.s32 32, 32
      %12 = vsyncadd [#allocation3], %s11
      %s14 = sshll.u32 [#allocation2], 4
      %s15 = int_to_ptr.vmem [resolvable:$true] %s14
      %17 = dma.hbm_to_vmem [thread:$0]  %s0, 32, %s15, [#allocation3]
    $region5: #{tpu_custom_call.1} parent=1 // pred_fallthru
      _
    // Predicated region
    $region6: #{tpu_custom_call.1} parent=1 // pred_check
      _
    $region7: #{tpu_custom_call.1} parent=1 // pred_check_branch
      %19 = sbr.rel (0) target = $region9
    $region8: #{tpu_custom_call.1} parent=1 // pred_region
      %20 = dma.done [#allocation3], 32
    $region9: #{tpu_custom_call.1} parent=1 // pred_fallthru
      _
    %v21 = vld [vmem:[#allocation2] sm:$0x3]
    %vm22 = vcmask 189441
    %v23 = vsel %vm22, %v21, -inf
    %24 = vmax.xlane.f32.xlu0 %v23
    %v25 = vpop.xlane.xlu0 %24
    %v26 = vsub.f32 %v21, %v25
    %v27 = vmul.f32 %v26, 1.442695
    %v28 = vpow.pop %v27
    %v30 = vrot.slane %v28, 1
    %v32 = vmul.f32 %v21, %v30
    %vm33 = vcmask 1040384
    %v34 = vsel %vm33, %v32, %v28
    %vm35 = vcmask 189440
    %v36 = vsel %vm35, %v34, 0.0
    %37 = vadd.xlane.f32.xlu0 %v36
    %v38 = vpop.xlane.xlu0 %37
    %v39 = vmul.f32 %v38, 24.0
    %v41 = vrot.slane %v39, 1
    %v43 = vrcp.pop %v41
    %v44 = vmul.f32 %v38, %v43
    %vm45 = vcmask 0
    %46 = vst.msk [vmem:[#allocation5] sm:$0x1] %vm45, %v44
    // Predicated region
    $region10: #{tpu_custom_call.1} parent=1 // pred_check
      _
    $region11: #{tpu_custom_call.1} parent=1 // pred_check_branch
      %48 = sbr.rel (0) target = $region13
    $region12: #{tpu_custom_call.1} parent=1 // pred_region
      %s50 = ssub.s32 16, 16
      %51 = vsyncadd [#allocation4], %s50
      %s53 = sshll.u32 [#allocation5], 4
      %s54 = int_to_ptr.vmem [resolvable:$true] %s53
      %56 = dma.vmem_to_hbm [thread:$0]  %s54, 16, %s1, [#allocation4]
    $region13: #{tpu_custom_call.1} parent=1 // pred_fallthru
      _
    // Predicated region
    $region14: #{tpu_custom_call.1} parent=1 // pred_check
      _
    $region15: #{tpu_custom_call.1} parent=1 // pred_check_branch
      %58 = sbr.rel (0) target = $region17
    $region16: #{tpu_custom_call.1} parent=1 // pred_region
      %59 = dma.done [#allocation4], 16
    $region17: #{tpu_custom_call.1} parent=1 // pred_fallthru
      _
    %60 = vsyncpa [#allocation3], 1
    %61 = vsyncpa [#allocation4], 1

</llo_original>
